<compile_context>
chip_gen: v5e
topology: v5e:2x2
jax: 0.10.0
libtpu: 0.0.40
codegen_flags: <defaults>
</compile_context>

<pallas_src>
import functools

import numpy as np

import jax
import jax.numpy as jnp
from jax.experimental import pallas as pl
from jax.experimental.pallas import tpu as pltpu


# ---------------------------------------------------------------------------
# Pallas kernel: fused (transposed) matmul + bias + activation
#   out(Cout, tile_m) = act( W(Cout, K) @ P(K, tile_m) + b(Cout, 1) )
# ---------------------------------------------------------------------------
def _matmul_bias_act_kernel(w_ref, p_ref, b_ref, o_ref, *, act):
    acc = jnp.dot(w_ref[...], p_ref[...], preferred_element_type=jnp.float32)
    acc = acc + b_ref[...]
    if act == "relu":
        acc = jnp.maximum(acc, 0.0)
    elif act == "sigmoid":
        acc = jax.nn.sigmoid(acc)
    # act == "none" -> identity
    o_ref[...] = acc.astype(o_ref.dtype)


def matmul_bias_act(wt, patches, bias, act, *, compute_dtype=jnp.bfloat16,
                    max_tile_m=512):
    """wt: (Cout, K), patches: (K, M), bias: (Cout,) -> f32 (Cout, M)."""
    Cout, K = wt.shape
    K2, M = patches.shape
    assert K == K2

    # Tile the lane-dense M axis; keep it divisible so every block is full.
    tile_m = min(M, max_tile_m)
    while M % tile_m:
        tile_m //= 2
    grid_m = M // tile_m

    wt_c = wt.astype(compute_dtype)
    p_c = patches.astype(compute_dtype)
    b2 = bias.reshape(Cout, 1).astype(jnp.float32)

    itemsize = jnp.dtype(compute_dtype).itemsize
    cost = pl.CostEstimate(
        flops=2 * M * K * Cout,
        transcendentals=M * Cout if act == "sigmoid" else 0,
        bytes_accessed=itemsize * (M * K + K * Cout) + 4 * (M * Cout + Cout),
    )

    kernel = functools.partial(_matmul_bias_act_kernel, act=act)
    return pl.pallas_call(
        kernel,
        out_shape=jax.ShapeDtypeStruct((Cout, M), jnp.float32),
        grid=(grid_m,),
        in_specs=[
            pl.BlockSpec((Cout, K), lambda i: (0, 0)),      # weights: resident
            pl.BlockSpec((K, tile_m), lambda i: (0, i)),    # patches: pipelined
            pl.BlockSpec((Cout, 1), lambda i: (0, 0)),      # bias: resident
        ],
        out_specs=pl.BlockSpec((Cout, tile_m), lambda i: (0, i)),
        compiler_params=pltpu.CompilerParams(
            dimension_semantics=("parallel",)),
        cost_estimate=cost,
    )(wt_c, p_c, b2)


# ---------------------------------------------------------------------------
# Glue: im2col in (K, M) layout from channel-major activations (no compute)
# ---------------------------------------------------------------------------
def _extract_patches_km(x, kh, kw, stride):
    """x: (C, N, H, W), already spatially padded.
    Returns (kh*kw*C, N*Ho*Wo) with K ordered as (di*kw + dj)*C + c."""
    C, N, H, W = x.shape
    Ho = (H - kh) // stride + 1
    Wo = (W - kw) // stride + 1
    taps = []
    for di in range(kh):
        for dj in range(kw):
            taps.append(x[:, :,
                          di:di + stride * (Ho - 1) + 1:stride,
                          dj:dj + stride * (Wo - 1) + 1:stride])
    p = jnp.stack(taps, axis=0)                      # (kh*kw, C, N, Ho, Wo)
    return p.reshape(kh * kw * C, N * Ho * Wo), Ho, Wo


def conv2d(x, w, b, stride, padding, act, compute_dtype):
    """x: (Cin, N, H, W); w: (Cout, Cin, kh, kw) (PyTorch Conv2d layout)."""
    Cout, Cin, kh, kw = w.shape
    N = x.shape[1]
    xp = jnp.pad(x, ((0, 0), (0, 0), (padding, padding), (padding, padding)))
    patches, Ho, Wo = _extract_patches_km(xp, kh, kw, stride)
    wt = jnp.transpose(w, (0, 2, 3, 1)).reshape(Cout, kh * kw * Cin)
    out = matmul_bias_act(wt, patches, b, act, compute_dtype=compute_dtype)
    return out.reshape(Cout, N, Ho, Wo)


def _subpixel_weight(w):
    """ConvTranspose2d(k=4, s=2, p=1) weight (Cin, Cout, 4, 4) -> sub-pixel
    weight (4*Cout, 9*Cin) for a 3x3/stride-1 conv over the 1-padded input.
    Output-channel order is (co, rh, rw); column order is (a, b, ci).

    For output row oh = 2*m + r the contributing input rows are ih = m + a - 1
    (a in {0,1,2}) with kernel tap kh = 3 + r - 2*a when 0 <= kh <= 3, else 0.
    """
    Cin, Cout = w.shape[0], w.shape[1]
    # tap index 4 selects a zero plane (contribution outside the 4x4 kernel)
    wp = jnp.pad(w, ((0, 0), (0, 0), (0, 1), (0, 1)))
    idx = np.full((2, 3), 4, np.int32)               # [r, a] -> kernel tap or 4
    for r in range(2):
        for a in range(3):
            k = 3 + r - 2 * a
            if 0 <= k <= 3:
                idx[r, a] = k
    idx = jnp.asarray(idx)
    # g[ci, co, rh, a, rw, b] = wp[ci, co, idx[rh, a], idx[rw, b]]
    g = wp[:, :, idx[:, :, None, None], idx[None, None, :, :]]
    wt = jnp.transpose(g, (1, 2, 4, 3, 5, 0))        # (co, rh, rw, a, b, ci)
    return wt.reshape(Cout * 4, 9 * Cin)


def conv_transpose2d(x, w, b, act, compute_dtype):
    """ConvTranspose2d(kernel=4, stride=2, padding=1), sub-pixel formulation.
    x: (Cin, N, H, W); w: (Cin, Cout, 4, 4) (PyTorch layout). Output is
    (Cout, N, 2H, 2W). Exactly equivalent to the zero-dilation construction."""
    Cin, Cout = w.shape[0], w.shape[1]
    C, N, H, W = x.shape
    xp = jnp.pad(x, ((0, 0), (0, 0), (1, 1), (1, 1)))
    patches, Ho, Wo = _extract_patches_km(xp, 3, 3, 1)          # Ho=H, Wo=W
    wt = _subpixel_weight(w)                                    # (4*Cout, 9*Cin)
    b_eff = jnp.repeat(b, 4)                                    # (co, rh, rw)
    out = matmul_bias_act(wt, patches, b_eff, act, compute_dtype=compute_dtype)
    out = out.reshape(Cout, 2, 2, N, H, W)
    out = jnp.transpose(out, (0, 3, 4, 1, 5, 2))                # depth-to-space
    return out.reshape(Cout, N, 2 * H, 2 * W)


# ---------------------------------------------------------------------------
# Autoencoder forward (matches the PyTorch module)
# ---------------------------------------------------------------------------
def autoencoder_forward(x_nchw, params, compute_dtype=jnp.bfloat16):
    # single layout conversion at entry: NCHW -> channel-major (C, N, H, W)
    x = jnp.transpose(x_nchw, (1, 0, 2, 3))
    # encoder: 3x (Conv2d k=4 s=2 p=1 + ReLU)
    h = conv2d(x, params["e1_w"], params["e1_b"], 2, 1, "relu", compute_dtype)
    h = conv2d(h, params["e2_w"], params["e2_b"], 2, 1, "relu", compute_dtype)
    enc = conv2d(h, params["e3_w"], params["e3_b"], 2, 1, "relu", compute_dtype)
    # decoder: 2x (ConvTranspose2d + ReLU) + (ConvTranspose2d + Sigmoid)
    d = conv_transpose2d(enc, params["d1_w"], params["d1_b"], "relu", compute_dtype)
    d = conv_transpose2d(d, params["d2_w"], params["d2_b"], "relu", compute_dtype)
    dec = conv_transpose2d(d, params["d3_w"], params["d3_b"], "sigmoid", compute_dtype)
    # single conversion back to NCHW at exit
    return (jnp.transpose(enc, (1, 0, 2, 3)),
            jnp.transpose(dec, (1, 0, 2, 3)))


# ---------------------------------------------------------------------------
# Pure-XLA reference (for the in-script numerical self-check)
# ---------------------------------------------------------------------------
def _ref_conv(x, w, b, stride, padding):
    out = jax.lax.conv_general_dilated(
        x, w, window_strides=(stride, stride),
        padding=[(padding, padding)] * 2,
        dimension_numbers=("NCHW", "OIHW", "NCHW"),
        precision=jax.lax.Precision.HIGHEST)
    return out + b.reshape(1, -1, 1, 1)


def _ref_conv_transpose(x, w, b, stride, padding):
    k = w.shape[2]
    w_conv = jnp.transpose(jnp.flip(w, (2, 3)), (1, 0, 2, 3))
    out = jax.lax.conv_general_dilated(
        x, w_conv, window_strides=(1, 1),
        padding=[(k - 1 - padding, k - 1 - padding)] * 2,
        lhs_dilation=(stride, stride),
        dimension_numbers=("NCHW", "OIHW", "NCHW"),
        precision=jax.lax.Precision.HIGHEST)
    return out + b.reshape(1, -1, 1, 1)


def reference_forward(x, p):
    h = jax.nn.relu(_ref_conv(x, p["e1_w"], p["e1_b"], 2, 1))
    h = jax.nn.relu(_ref_conv(h, p["e2_w"], p["e2_b"], 2, 1))
    enc = jax.nn.relu(_ref_conv(h, p["e3_w"], p["e3_b"], 2, 1))
    d = jax.nn.relu(_ref_conv_transpose(enc, p["d1_w"], p["d1_b"], 2, 1))
    d = jax.nn.relu(_ref_conv_transpose(d, p["d2_w"], p["d2_b"], 2, 1))
    dec = jax.nn.sigmoid(_ref_conv_transpose(d, p["d3_w"], p["d3_b"], 2, 1))
    return enc, dec


# ---------------------------------------------------------------------------
# Params + main
# ---------------------------------------------------------------------------
def init_params(key):
    """Deterministic synthetic init (uniform, PyTorch-like fan-in bound)."""
    def u(key, shape, fan_in):
        bound = 1.0 / jnp.sqrt(jnp.float32(fan_in))
        return jax.random.uniform(key, shape, jnp.float32, -bound, bound)

    ks = jax.random.split(key, 12)
    p = {}
    # encoder Conv2d weights: (Cout, Cin, 4, 4)
    p["e1_w"] = u(ks[0], (6, 3, 4, 4), 3 * 16)
    p["e1_b"] = u(ks[1], (6,), 3 * 16)
    p["e2_w"] = u(ks[2], (6, 6, 4, 4), 6 * 16)
    p["e2_b"] = u(ks[3], (6,), 6 * 16)
    p["e3_w"] = u(ks[4], (6, 6, 4, 4), 6 * 16)
    p["e3_b"] = u(ks[5], (6,), 6 * 16)
    # decoder ConvTranspose2d weights: (Cin, Cout, 4, 4)
    p["d1_w"] = u(ks[6], (6, 6, 4, 4), 6 * 16)
    p["d1_b"] = u(ks[7], (6,), 6 * 16)
    p["d2_w"] = u(ks[8], (6, 6, 4, 4), 6 * 16)
    p["d2_b"] = u(ks[9], (6,), 6 * 16)
    p["d3_w"] = u(ks[10], (6, 3, 4, 4), 3 * 16)
    p["d3_b"] = u(ks[11], (3,), 3 * 16)
    return p


if __name__ == "__main__":
    key = jax.random.PRNGKey(0)
    k_x, k_p = jax.random.split(key)
    # CIFAR-10-shaped input at a small batch: NCHW (2, 3, 32, 32)
    x = jax.random.normal(k_x, (2, 3, 32, 32), dtype=jnp.float32)
    params = init_params(k_p)

    fwd_bf16 = jax.jit(functools.partial(autoencoder_forward,
                                         compute_dtype=jnp.bfloat16))
    fwd_f32 = jax.jit(functools.partial(autoencoder_forward,
                                        compute_dtype=jnp.float32))

    enc, dec = fwd_bf16(x, params)
    jax.block_until_ready((enc, dec))

    assert enc.shape == (2, 6, 4, 4), enc.shape        # bottleneck 6*4*4
    assert dec.shape == (2, 3, 32, 32), dec.shape      # reconstruction
    assert bool(jnp.all(enc >= 0.0))                   # ReLU output
    assert bool(jnp.all((dec >= 0.0) & (dec <= 1.0)))  # Sigmoid output

    # numerical self-check vs. the XLA reference implementation
    enc_ref, dec_ref = jax.jit(reference_forward)(x, params)
    enc32, dec32 = fwd_f32(x, params)
    jax.block_until_ready((enc_ref, dec_ref, enc32, dec32))
    assert bool(jnp.allclose(enc32, enc_ref, atol=2e-3, rtol=2e-3))
    assert bool(jnp.allclose(dec32, dec_ref, atol=2e-3, rtol=2e-3))
    assert bool(jnp.allclose(enc, enc_ref, atol=1e-1, rtol=1e-1))   # bf16 path
    assert bool(jnp.allclose(dec, dec_ref, atol=1e-1, rtol=1e-1))

    print("KERNEL_OK")
</pallas_src>

<mosaic_0001>
module attributes {stable_mosaic.version = 11 : i64} {
  func.func @_matmul_bias_act_kernel(%arg0: i32, %arg1: memref<6x48xbf16, #tpu.memory_space<vmem>>, %arg2: memref<48x512xbf16, #tpu.memory_space<vmem>>, %arg3: memref<6x1xf32, #tpu.memory_space<vmem>>, %arg4: memref<6x512xf32, #tpu.memory_space<vmem>>) attributes {dimension_semantics = [#tpu.dimension_semantics<parallel>], iteration_bounds = array<i64: 1>, scalar_prefetch = 0 : i64, scratch_operands = 0 : i64, tpu.core_type = #tpu.core_type<tc>, window_params = [{pipeline_mode = #tpu.pipeline_mode<synchronous>, transform_indices = @transform_0, window_bounds = array<i64: 6, 48>}, {transform_indices = @transform_1, window_bounds = array<i64: 48, 512>}, {pipeline_mode = #tpu.pipeline_mode<synchronous>, transform_indices = @transform_2, window_bounds = array<i64: 6, 1>}, {transform_indices = @transform_3, window_bounds = array<i64: 6, 512>}]} {
    %c0 = arith.constant 0 : index
    %c0_0 = arith.constant 0 : index
    %0 = vector.load %arg1[%c0, %c0_0] : memref<6x48xbf16, #tpu.memory_space<vmem>>, vector<6x48xbf16>
    %c0_1 = arith.constant 0 : index
    %c0_2 = arith.constant 0 : index
    %1 = vector.load %arg2[%c0_1, %c0_2] : memref<48x512xbf16, #tpu.memory_space<vmem>>, vector<48x512xbf16>
    %cst = arith.constant dense<0.000000e+00> : vector<6x512xf32>
    %2 = tpu.matmul %0, %1, %cst {dimension_numbers = #tpu.dot_dimension_numbers<[1], [0], [0], [1], [0, 0, 1, 1], [], []>} : vector<6x48xbf16>, vector<48x512xbf16>, vector<6x512xf32> -> vector<6x512xf32>
    %c0_3 = arith.constant 0 : index
    %c0_4 = arith.constant 0 : index
    %3 = vector.load %arg3[%c0_3, %c0_4] : memref<6x1xf32, #tpu.memory_space<vmem>>, vector<6x1xf32>
    %4 = vector.broadcast %3 : vector<6x1xf32> to vector<6x512xf32>
    %5 = arith.addf %2, %4 : vector<6x512xf32>
    %cst_5 = arith.constant 0.000000e+00 : f32
    %6 = vector.broadcast %cst_5 : f32 to vector<6x512xf32>
    %7 = arith.maximumf %5, %6 : vector<6x512xf32>
    %c0_6 = arith.constant 0 : index
    %c0_7 = arith.constant 0 : index
    %8 = vector.load %arg4[%c0_6, %c0_7] : memref<6x512xf32, #tpu.memory_space<vmem>>, vector<6x512xf32>
    tpu.vector_store %arg4[%c0_6, %c0_7], %7 {strides = array<i32>} : memref<6x512xf32, #tpu.memory_space<vmem>>, vector<6x512xf32>,
    return
  }
  func.func @transform_0(%arg0: i32) -> (i32, i32) {
    %c0_i32 = arith.constant 0 : i32
    %c0_i32_0 = arith.constant 0 : i32
    %c0_i32_1 = arith.constant 0 : i32
    return %c0_i32, %c0_i32_0 : i32, i32
  }
  func.func @transform_1(%arg0: i32) -> (i32, i32) {
    %c0_i32 = arith.constant 0 : i32
    %c0_i32_0 = arith.constant 0 : i32
    return %c0_i32, %arg0 : i32, i32
  }
  func.func @transform_2(%arg0: i32) -> (i32, i32) {
    %c0_i32 = arith.constant 0 : i32
    %c0_i32_0 = arith.constant 0 : i32
    %c0_i32_1 = arith.constant 0 : i32
    return %c0_i32, %c0_i32_0 : i32, i32
  }
  func.func @transform_3(%arg0: i32) -> (i32, i32) {
    %c0_i32 = arith.constant 0 : i32
    %c0_i32_0 = arith.constant 0 : i32
    return %c0_i32, %arg0 : i32, i32
  }
}

module attributes {stable_mosaic.version = 11 : i64} {
  func.func @_matmul_bias_act_kernel(%arg0: i32, %arg1: memref<6x96xbf16, #tpu.memory_space<vmem>>, %arg2: memref<96x128xbf16, #tpu.memory_space<vmem>>, %arg3: memref<6x1xf32, #tpu.memory_space<vmem>>, %arg4: memref<6x128xf32, #tpu.memory_space<vmem>>) attributes {dimension_semantics = [#tpu.dimension_semantics<parallel>], iteration_bounds = array<i64: 1>, scalar_prefetch = 0 : i64, scratch_operands = 0 : i64, tpu.core_type = #tpu.core_type<tc>, window_params = [{pipeline_mode = #tpu.pipeline_mode<synchronous>, transform_indices = @transform_0, window_bounds = array<i64: 6, 96>}, {transform_indices = @transform_1, window_bounds = array<i64: 96, 128>}, {pipeline_mode = #tpu.pipeline_mode<synchronous>, transform_indices = @transform_2, window_bounds = array<i64: 6, 1>}, {transform_indices = @transform_3, window_bounds = array<i64: 6, 128>}]} {
    %c0 = arith.constant 0 : index
    %c0_0 = arith.constant 0 : index
    %0 = vector.load %arg1[%c0, %c0_0] : memref<6x96xbf16, #tpu.memory_space<vmem>>, vector<6x96xbf16>
    %c0_1 = arith.constant 0 : index
    %c0_2 = arith.constant 0 : index
    %1 = vector.load %arg2[%c0_1, %c0_2] : memref<96x128xbf16, #tpu.memory_space<vmem>>, vector<96x128xbf16>
    %cst = arith.constant dense<0.000000e+00> : vector<6x128xf32>
    %2 = tpu.matmul %0, %1, %cst {dimension_numbers = #tpu.dot_dimension_numbers<[1], [0], [0], [1], [0, 0, 1, 1], [], []>} : vector<6x96xbf16>, vector<96x128xbf16>, vector<6x128xf32> -> vector<6x128xf32>
    %c0_3 = arith.constant 0 : index
    %c0_4 = arith.constant 0 : index
    %3 = vector.load %arg3[%c0_3, %c0_4] : memref<6x1xf32, #tpu.memory_space<vmem>>, vector<6x1xf32>
    %4 = vector.broadcast %3 : vector<6x1xf32> to vector<6x128xf32>
    %5 = arith.addf %2, %4 : vector<6x128xf32>
    %cst_5 = arith.constant 0.000000e+00 : f32
    %6 = vector.broadcast %cst_5 : f32 to vector<6x128xf32>
    %7 = arith.maximumf %5, %6 : vector<6x128xf32>
    %c0_6 = arith.constant 0 : index
    %c0_7 = arith.constant 0 : index
    %8 = vector.load %arg4[%c0_6, %c0_7] : memref<6x128xf32, #tpu.memory_space<vmem>>, vector<6x128xf32>
    tpu.vector_store %arg4[%c0_6, %c0_7], %7 {strides = array<i32>} : memref<6x128xf32, #tpu.memory_space<vmem>>, vector<6x128xf32>,
    return
  }
  func.func @transform_0(%arg0: i32) -> (i32, i32) {
    %c0_i32 = arith.constant 0 : i32
    %c0_i32_0 = arith.constant 0 : i32
    %c0_i32_1 = arith.constant 0 : i32
    return %c0_i32, %c0_i32_0 : i32, i32
  }
  func.func @transform_1(%arg0: i32) -> (i32, i32) {
    %c0_i32 = arith.constant 0 : i32
    %c0_i32_0 = arith.constant 0 : i32
    return %c0_i32, %arg0 : i32, i32
  }
  func.func @transform_2(%arg0: i32) -> (i32, i32) {
    %c0_i32 = arith.constant 0 : i32
    %c0_i32_0 = arith.constant 0 : i32
    %c0_i32_1 = arith.constant 0 : i32
    return %c0_i32, %c0_i32_0 : i32, i32
  }
  func.func @transform_3(%arg0: i32) -> (i32, i32) {
    %c0_i32 = arith.constant 0 : i32
    %c0_i32_0 = arith.constant 0 : i32
    return %c0_i32, %arg0 : i32, i32
  }
}

module attributes {stable_mosaic.version = 11 : i64} {
  func.func @_matmul_bias_act_kernel(%arg0: i32, %arg1: memref<6x96xbf16, #tpu.memory_space<vmem>>, %arg2: memref<96x32xbf16, #tpu.memory_space<vmem>>, %arg3: memref<6x1xf32, #tpu.memory_space<vmem>>, %arg4: memref<6x32xf32, #tpu.memory_space<vmem>>) attributes {dimension_semantics = [#tpu.dimension_semantics<parallel>], iteration_bounds = array<i64: 1>, scalar_prefetch = 0 : i64, scratch_operands = 0 : i64, tpu.core_type = #tpu.core_type<tc>, window_params = [{pipeline_mode = #tpu.pipeline_mode<synchronous>, transform_indices = @transform_0, window_bounds = array<i64: 6, 96>}, {transform_indices = @transform_1, window_bounds = array<i64: 96, 32>}, {pipeline_mode = #tpu.pipeline_mode<synchronous>, transform_indices = @transform_2, window_bounds = array<i64: 6, 1>}, {transform_indices = @transform_3, window_bounds = array<i64: 6, 32>}]} {
    %c0 = arith.constant 0 : index
    %c0_0 = arith.constant 0 : index
    %0 = vector.load %arg1[%c0, %c0_0] : memref<6x96xbf16, #tpu.memory_space<vmem>>, vector<6x96xbf16>
    %c0_1 = arith.constant 0 : index
    %c0_2 = arith.constant 0 : index
    %1 = vector.load %arg2[%c0_1, %c0_2] : memref<96x32xbf16, #tpu.memory_space<vmem>>, vector<96x32xbf16>
    %cst = arith.constant dense<0.000000e+00> : vector<6x32xf32>
    %2 = tpu.matmul %0, %1, %cst {dimension_numbers = #tpu.dot_dimension_numbers<[1], [0], [0], [1], [0, 0, 1, 1], [], []>} : vector<6x96xbf16>, vector<96x32xbf16>, vector<6x32xf32> -> vector<6x32xf32>
    %c0_3 = arith.constant 0 : index
    %c0_4 = arith.constant 0 : index
    %3 = vector.load %arg3[%c0_3, %c0_4] : memref<6x1xf32, #tpu.memory_space<vmem>>, vector<6x1xf32>
    %4 = vector.broadcast %3 : vector<6x1xf32> to vector<6x32xf32>
    %5 = arith.addf %2, %4 : vector<6x32xf32>
    %cst_5 = arith.constant 0.000000e+00 : f32
    %6 = vector.broadcast %cst_5 : f32 to vector<6x32xf32>
    %7 = arith.maximumf %5, %6 : vector<6x32xf32>
    %c0_6 = arith.constant 0 : index
    %c0_7 = arith.constant 0 : index
    %8 = vector.load %arg4[%c0_6, %c0_7] : memref<6x32xf32, #tpu.memory_space<vmem>>, vector<6x32xf32>
    tpu.vector_store %arg4[%c0_6, %c0_7], %7 {strides = array<i32>} : memref<6x32xf32, #tpu.memory_space<vmem>>, vector<6x32xf32>,
    return
  }
  func.func @transform_0(%arg0: i32) -> (i32, i32) {
    %c0_i32 = arith.constant 0 : i32
    %c0_i32_0 = arith.constant 0 : i32
    %c0_i32_1 = arith.constant 0 : i32
    return %c0_i32, %c0_i32_0 : i32, i32
  }
  func.func @transform_1(%arg0: i32) -> (i32, i32) {
    %c0_i32 = arith.constant 0 : i32
    %c0_i32_0 = arith.constant 0 : i32
    return %c0_i32, %arg0 : i32, i32
  }
  func.func @transform_2(%arg0: i32) -> (i32, i32) {
    %c0_i32 = arith.constant 0 : i32
    %c0_i32_0 = arith.constant 0 : i32
    %c0_i32_1 = arith.constant 0 : i32
    return %c0_i32, %c0_i32_0 : i32, i32
  }
  func.func @transform_3(%arg0: i32) -> (i32, i32) {
    %c0_i32 = arith.constant 0 : i32
    %c0_i32_0 = arith.constant 0 : i32
    return %c0_i32, %arg0 : i32, i32
  }
}

module attributes {stable_mosaic.version = 11 : i64} {
  func.func @_matmul_bias_act_kernel(%arg0: i32, %arg1: memref<24x54xbf16, #tpu.memory_space<vmem>>, %arg2: memref<54x32xbf16, #tpu.memory_space<vmem>>, %arg3: memref<24x1xf32, #tpu.memory_space<vmem>>, %arg4: memref<24x32xf32, #tpu.memory_space<vmem>>) attributes {dimension_semantics = [#tpu.dimension_semantics<parallel>], iteration_bounds = array<i64: 1>, scalar_prefetch = 0 : i64, scratch_operands = 0 : i64, tpu.core_type = #tpu.core_type<tc>, window_params = [{pipeline_mode = #tpu.pipeline_mode<synchronous>, transform_indices = @transform_0, window_bounds = array<i64: 24, 54>}, {transform_indices = @transform_1, window_bounds = array<i64: 54, 32>}, {pipeline_mode = #tpu.pipeline_mode<synchronous>, transform_indices = @transform_2, window_bounds = array<i64: 24, 1>}, {transform_indices = @transform_3, window_bounds = array<i64: 24, 32>}]} {
    %c0 = arith.constant 0 : index
    %c0_0 = arith.constant 0 : index
    %0 = vector.load %arg1[%c0, %c0_0] : memref<24x54xbf16, #tpu.memory_space<vmem>>, vector<24x54xbf16>
    %c0_1 = arith.constant 0 : index
    %c0_2 = arith.constant 0 : index
    %1 = vector.load %arg2[%c0_1, %c0_2] : memref<54x32xbf16, #tpu.memory_space<vmem>>, vector<54x32xbf16>
    %cst = arith.constant dense<0.000000e+00> : vector<24x32xf32>
    %2 = tpu.matmul %0, %1, %cst {dimension_numbers = #tpu.dot_dimension_numbers<[1], [0], [0], [1], [0, 0, 1, 1], [], []>} : vector<24x54xbf16>, vector<54x32xbf16>, vector<24x32xf32> -> vector<24x32xf32>
    %c0_3 = arith.constant 0 : index
    %c0_4 = arith.constant 0 : index
    %3 = vector.load %arg3[%c0_3, %c0_4] : memref<24x1xf32, #tpu.memory_space<vmem>>, vector<24x1xf32>
    %4 = vector.broadcast %3 : vector<24x1xf32> to vector<24x32xf32>
    %5 = arith.addf %2, %4 : vector<24x32xf32>
    %cst_5 = arith.constant 0.000000e+00 : f32
    %6 = vector.broadcast %cst_5 : f32 to vector<24x32xf32>
    %7 = arith.maximumf %5, %6 : vector<24x32xf32>
    %c0_6 = arith.constant 0 : index
    %c0_7 = arith.constant 0 : index
    %8 = vector.load %arg4[%c0_6, %c0_7] : memref<24x32xf32, #tpu.memory_space<vmem>>, vector<24x32xf32>
    tpu.vector_store %arg4[%c0_6, %c0_7], %7 {strides = array<i32>} : memref<24x32xf32, #tpu.memory_space<vmem>>, vector<24x32xf32>,
    return
  }
  func.func @transform_0(%arg0: i32) -> (i32, i32) {
    %c0_i32 = arith.constant 0 : i32
    %c0_i32_0 = arith.constant 0 : i32
    %c0_i32_1 = arith.constant 0 : i32
    return %c0_i32, %c0_i32_0 : i32, i32
  }
  func.func @transform_1(%arg0: i32) -> (i32, i32) {
    %c0_i32 = arith.constant 0 : i32
    %c0_i32_0 = arith.constant 0 : i32
    return %c0_i32, %arg0 : i32, i32
  }
  func.func @transform_2(%arg0: i32) -> (i32, i32) {
    %c0_i32 = arith.constant 0 : i32
    %c0_i32_0 = arith.constant 0 : i32
    %c0_i32_1 = arith.constant 0 : i32
    return %c0_i32, %c0_i32_0 : i32, i32
  }
  func.func @transform_3(%arg0: i32) -> (i32, i32) {
    %c0_i32 = arith.constant 0 : i32
    %c0_i32_0 = arith.constant 0 : i32
    return %c0_i32, %arg0 : i32, i32
  }
}

module attributes {stable_mosaic.version = 11 : i64} {
  func.func @_matmul_bias_act_kernel(%arg0: i32, %arg1: memref<24x54xbf16, #tpu.memory_space<vmem>>, %arg2: memref<54x128xbf16, #tpu.memory_space<vmem>>, %arg3: memref<24x1xf32, #tpu.memory_space<vmem>>, %arg4: memref<24x128xf32, #tpu.memory_space<vmem>>) attributes {dimension_semantics = [#tpu.dimension_semantics<parallel>], iteration_bounds = array<i64: 1>, scalar_prefetch = 0 : i64, scratch_operands = 0 : i64, tpu.core_type = #tpu.core_type<tc>, window_params = [{pipeline_mode = #tpu.pipeline_mode<synchronous>, transform_indices = @transform_0, window_bounds = array<i64: 24, 54>}, {transform_indices = @transform_1, window_bounds = array<i64: 54, 128>}, {pipeline_mode = #tpu.pipeline_mode<synchronous>, transform_indices = @transform_2, window_bounds = array<i64: 24, 1>}, {transform_indices = @transform_3, window_bounds = array<i64: 24, 128>}]} {
    %c0 = arith.constant 0 : index
    %c0_0 = arith.constant 0 : index
    %0 = vector.load %arg1[%c0, %c0_0] : memref<24x54xbf16, #tpu.memory_space<vmem>>, vector<24x54xbf16>
    %c0_1 = arith.constant 0 : index
    %c0_2 = arith.constant 0 : index
    %1 = vector.load %arg2[%c0_1, %c0_2] : memref<54x128xbf16, #tpu.memory_space<vmem>>, vector<54x128xbf16>
    %cst = arith.constant dense<0.000000e+00> : vector<24x128xf32>
    %2 = tpu.matmul %0, %1, %cst {dimension_numbers = #tpu.dot_dimension_numbers<[1], [0], [0], [1], [0, 0, 1, 1], [], []>} : vector<24x54xbf16>, vector<54x128xbf16>, vector<24x128xf32> -> vector<24x128xf32>
    %c0_3 = arith.constant 0 : index
    %c0_4 = arith.constant 0 : index
    %3 = vector.load %arg3[%c0_3, %c0_4] : memref<24x1xf32, #tpu.memory_space<vmem>>, vector<24x1xf32>
    %4 = vector.broadcast %3 : vector<24x1xf32> to vector<24x128xf32>
    %5 = arith.addf %2, %4 : vector<24x128xf32>
    %cst_5 = arith.constant 0.000000e+00 : f32
    %6 = vector.broadcast %cst_5 : f32 to vector<24x128xf32>
    %7 = arith.maximumf %5, %6 : vector<24x128xf32>
    %c0_6 = arith.constant 0 : index
    %c0_7 = arith.constant 0 : index
    %8 = vector.load %arg4[%c0_6, %c0_7] : memref<24x128xf32, #tpu.memory_space<vmem>>, vector<24x128xf32>
    tpu.vector_store %arg4[%c0_6, %c0_7], %7 {strides = array<i32>} : memref<24x128xf32, #tpu.memory_space<vmem>>, vector<24x128xf32>,
    return
  }
  func.func @transform_0(%arg0: i32) -> (i32, i32) {
    %c0_i32 = arith.constant 0 : i32
    %c0_i32_0 = arith.constant 0 : i32
    %c0_i32_1 = arith.constant 0 : i32
    return %c0_i32, %c0_i32_0 : i32, i32
  }
  func.func @transform_1(%arg0: i32) -> (i32, i32) {
    %c0_i32 = arith.constant 0 : i32
    %c0_i32_0 = arith.constant 0 : i32
    return %c0_i32, %arg0 : i32, i32
  }
  func.func @transform_2(%arg0: i32) -> (i32, i32) {
    %c0_i32 = arith.constant 0 : i32
    %c0_i32_0 = arith.constant 0 : i32
    %c0_i32_1 = arith.constant 0 : i32
    return %c0_i32, %c0_i32_0 : i32, i32
  }
  func.func @transform_3(%arg0: i32) -> (i32, i32) {
    %c0_i32 = arith.constant 0 : i32
    %c0_i32_0 = arith.constant 0 : i32
    return %c0_i32, %arg0 : i32, i32
  }
}

module attributes {stable_mosaic.version = 11 : i64} {
  func.func @_matmul_bias_act_kernel(%arg0: i32, %arg1: memref<12x54xbf16, #tpu.memory_space<vmem>>, %arg2: memref<54x512xbf16, #tpu.memory_space<vmem>>, %arg3: memref<12x1xf32, #tpu.memory_space<vmem>>, %arg4: memref<12x512xf32, #tpu.memory_space<vmem>>) attributes {dimension_semantics = [#tpu.dimension_semantics<parallel>], iteration_bounds = array<i64: 1>, scalar_prefetch = 0 : i64, scratch_operands = 0 : i64, tpu.core_type = #tpu.core_type<tc>, window_params = [{pipeline_mode = #tpu.pipeline_mode<synchronous>, transform_indices = @transform_0, window_bounds = array<i64: 12, 54>}, {transform_indices = @transform_1, window_bounds = array<i64: 54, 512>}, {pipeline_mode = #tpu.pipeline_mode<synchronous>, transform_indices = @transform_2, window_bounds = array<i64: 12, 1>}, {transform_indices = @transform_3, window_bounds = array<i64: 12, 512>}]} {
    %c0 = arith.constant 0 : index
    %c0_0 = arith.constant 0 : index
    %0 = vector.load %arg1[%c0, %c0_0] : memref<12x54xbf16, #tpu.memory_space<vmem>>, vector<12x54xbf16>
    %c0_1 = arith.constant 0 : index
    %c0_2 = arith.constant 0 : index
    %1 = vector.load %arg2[%c0_1, %c0_2] : memref<54x512xbf16, #tpu.memory_space<vmem>>, vector<54x512xbf16>
    %cst = arith.constant dense<0.000000e+00> : vector<12x512xf32>
    %2 = tpu.matmul %0, %1, %cst {dimension_numbers = #tpu.dot_dimension_numbers<[1], [0], [0], [1], [0, 0, 1, 1], [], []>} : vector<12x54xbf16>, vector<54x512xbf16>, vector<12x512xf32> -> vector<12x512xf32>
    %c0_3 = arith.constant 0 : index
    %c0_4 = arith.constant 0 : index
    %3 = vector.load %arg3[%c0_3, %c0_4] : memref<12x1xf32, #tpu.memory_space<vmem>>, vector<12x1xf32>
    %4 = vector.broadcast %3 : vector<12x1xf32> to vector<12x512xf32>
    %5 = arith.addf %2, %4 : vector<12x512xf32>
    %6 = arith.negf %5 : vector<12x512xf32>
    %7 = math.exp %6 : vector<12x512xf32>
    %cst_5 = arith.constant 1.000000e+00 : f32
    %8 = vector.broadcast %cst_5 : f32 to vector<12x512xf32>
    %9 = arith.addf %8, %7 : vector<12x512xf32>
    %10 = arith.divf %8, %9 : vector<12x512xf32>
    %c0_6 = arith.constant 0 : index
    %c0_7 = arith.constant 0 : index
    %11 = vector.load %arg4[%c0_6, %c0_7] : memref<12x512xf32, #tpu.memory_space<vmem>>, vector<12x512xf32>
    tpu.vector_store %arg4[%c0_6, %c0_7], %10 {strides = array<i32>} : memref<12x512xf32, #tpu.memory_space<vmem>>, vector<12x512xf32>,
    return
  }
  func.func @transform_0(%arg0: i32) -> (i32, i32) {
    %c0_i32 = arith.constant 0 : i32
    %c0_i32_0 = arith.constant 0 : i32
    %c0_i32_1 = arith.constant 0 : i32
    return %c0_i32, %c0_i32_0 : i32, i32
  }
  func.func @transform_1(%arg0: i32) -> (i32, i32) {
    %c0_i32 = arith.constant 0 : i32
    %c0_i32_0 = arith.constant 0 : i32
    return %c0_i32, %arg0 : i32, i32
  }
  func.func @transform_2(%arg0: i32) -> (i32, i32) {
    %c0_i32 = arith.constant 0 : i32
    %c0_i32_0 = arith.constant 0 : i32
    %c0_i32_1 = arith.constant 0 : i32
    return %c0_i32, %c0_i32_0 : i32, i32
  }
  func.func @transform_3(%arg0: i32) -> (i32, i32) {
    %c0_i32 = arith.constant 0 : i32
    %c0_i32_0 = arith.constant 0 : i32
    return %c0_i32, %arg0 : i32, i32
  }
}

</mosaic_0001>

<llo_original>
// kernel: autoencoder_forward.6
$region0: #{autoencoder_forward.6}
  #allocation0 [shape = 'u32[]', space=smem, size = 0x4, offset = 0x4, fixed_abs, tag = 'smem constant byte address 0x4 - core index']
  #allocation1 [shape = 'u32[72,128]{1,0:T(1,128)}', space=vmem, size = 0x9000, scoped, tag = 'internal scratch']
  %s0 = inlined_call_operand.vmem [shape: bf16[6,48], index: 0, kind: input, shape index: {}]
  %s1 = inlined_call_operand.vmem [shape: bf16[48,512], index: 1, kind: input, shape index: {}]
  %s2 = inlined_call_operand.vmem [shape: f32[6,1], index: 2, kind: input, shape index: {}]
  %s3 = inlined_call_operand.vmem [shape: f32[6,512], index: 3, kind: output, shape index: {}]
  %s4 = sld [smem:[#allocation0]]
  $region22: #{autoencoder_forward.6} parent=0
    _
  %s6 = ssub.s32 1, %s4
  %s7 = scalar_select 0, %s6, %s4
  // Predicated region
  $region2: #{autoencoder_forward.6} parent=0 // pred_check
    _
  $region3: #{autoencoder_forward.6} parent=0 // pred_check_branch
    %9 = sbr.rel (0) target = $region5
  $region4: #{autoencoder_forward.6} parent=0 // pred_region
    _
  $region5: #{autoencoder_forward.6} parent=0 // pred_fallthru
    _
  // Predicated region
  $region6: #{autoencoder_forward.6} parent=0 // pred_check
    _
  $region7: #{autoencoder_forward.6} parent=0 // pred_check_branch
    %11 = sbr.rel (0) target = $region9
  $region8: #{autoencoder_forward.6} parent=0 // pred_region
    _
  $region9: #{autoencoder_forward.6} parent=0 // pred_fallthru
    _
  // Predicated region
  $region10: #{autoencoder_forward.6} parent=0 // pred_check
    _
  $region11: #{autoencoder_forward.6} parent=0 // pred_check_branch
    %13 = sbr.rel (0) target = $region13
  $region12: #{autoencoder_forward.6} parent=0 // pred_region
    _
  $region13: #{autoencoder_forward.6} parent=0 // pred_fallthru
    _
  %v15 = vld [vmem:[%s0] sm:$0x7]
  %v16 = vld [vmem:[%s1] sm:$0xff]
  %v17 = vld [vmem:[%s1 + $0x8] sm:$0xff]
  %v18 = vld [vmem:[%s1 + $0x10] sm:$0xff]
  %v19 = vld [vmem:[%s1 + $0x18] sm:$0xff]
  %v20 = vld [vmem:[%s1 + $0x20] sm:$0xff]
  %v21 = vld [vmem:[%s1 + $0x28] sm:$0xff]
  %v22 = vld [vmem:[%s1 + $0x30] sm:$0xff]
  %v23 = vld [vmem:[%s1 + $0x38] sm:$0xff]
  %v24 = vld [vmem:[%s1 + $0x40] sm:$0xff]
  %v25 = vld [vmem:[%s1 + $0x48] sm:$0xff]
  %v26 = vld [vmem:[%s1 + $0x50] sm:$0xff]
  %v27 = vld [vmem:[%s1 + $0x58] sm:$0xff]
  %v28 = vld [vmem:[%s2] sm:$0x3f]
  %30 = vset.pattern.permute.xlu0 0
  %31 = vperm.xlu0 %30, %v28
  %v32 = vpop.permute.xlu0 %31
  %v46 = vunpack.c.l.b16 %v16
  %v47 = vunpack.c.h.b16 %v16
  %v48 = vunpack.c.l.b16 %v17
  %v49 = vunpack.c.h.b16 %v17
  %v50 = vunpack.c.l.b16 %v18
  %v51 = vunpack.c.h.b16 %v18
  %v52 = vunpack.c.l.b16 %v19
  %v53 = vunpack.c.h.b16 %v19
  %v54 = vunpack.c.l.b16 %v20
  %v55 = vunpack.c.h.b16 %v20
  %v56 = vunpack.c.l.b16 %v21
  %v57 = vunpack.c.h.b16 %v21
  %v58 = vunpack.c.l.b16 %v22
  %v59 = vunpack.c.h.b16 %v22
  %v60 = vunpack.c.l.b16 %v23
  %v61 = vunpack.c.h.b16 %v23
  %v62 = vunpack.c.l.b16 %v24
  %v63 = vunpack.c.h.b16 %v24
  %v64 = vunpack.c.l.b16 %v25
  %v65 = vunpack.c.h.b16 %v25
  %v66 = vunpack.c.l.b16 %v26
  %v67 = vunpack.c.h.b16 %v26
  %v68 = vunpack.c.l.b16 %v27
  %v69 = vunpack.c.h.b16 %v27
  %v70 = vpack.c.b16 %v50, %v46
  %v71 = vpack.c.b16 %v51, %v47
  %v72 = vpack.c.b16 %v52, %v48
  %v73 = vpack.c.b16 %v53, %v49
  %v74 = vpack.c.b16 %v58, %v54
  %v75 = vpack.c.b16 %v59, %v55
  %v76 = vpack.c.b16 %v60, %v56
  %v77 = vpack.c.b16 %v61, %v57
  %v78 = vpack.c.b16 %v66, %v62
  %v79 = vpack.c.b16 %v67, %v63
  %v80 = vpack.c.b16 %v68, %v64
  %v81 = vpack.c.b16 %v69, %v65
  %vm94 = vcmask 392192
  %v96 = vsel %vm94, %v15, 0
  %98 = vmatpush.bf16.msra.mxu0 0
  %99 = vmatpush.bf16.msra.mxu0 0
  %100 = vmatpush.bf16.msra.mxu0 0
  %101 = vmatpush.bf16.msra.mxu0 0
  %102 = vmatpush.bf16.msra.mxu0 0
  %103 = vmatpush.bf16.msra.mxu0 %v78
  %104 = vmatpush.bf16.msra.mxu0 %v74
  %105 = vmatpush.bf16.msra.mxu0 %v70
  %106 = vmatmul.bf16.gmra.mxu0 %v96
  %v107 = vpop.f32.mrf.mxu0
  %v108 = vadd.f32 %v32, %v107
  %v109 = vpop.f32.mrf.mxu0
  %110 = vdwg.mxu0
  %111 = vmatpush.bf16.msra.mxu0 0
  %112 = vmatpush.bf16.msra.mxu0 0
  %113 = vmatpush.bf16.msra.mxu0 0
  %114 = vmatpush.bf16.msra.mxu0 0
  %115 = vmatpush.bf16.msra.mxu0 0
  %116 = vmatpush.bf16.msra.mxu0 %v79
  %117 = vmatpush.bf16.msra.mxu0 %v75
  %118 = vmatpush.bf16.msra.mxu0 %v71
  %119 = vmatmul.bf16.gmra.mxu0 %v96
  %v120 = vpop.f32.mrf.mxu0
  %v121 = vadd.f32 %v32, %v120
  %v122 = vpop.f32.mrf.mxu0
  %123 = vdwg.mxu0
  %124 = vmatpush.bf16.msra.mxu0 0
  %125 = vmatpush.bf16.msra.mxu0 0
  %126 = vmatpush.bf16.msra.mxu0 0
  %127 = vmatpush.bf16.msra.mxu0 0
  %128 = vmatpush.bf16.msra.mxu0 0
  %129 = vmatpush.bf16.msra.mxu0 %v80
  %130 = vmatpush.bf16.msra.mxu0 %v76
  %131 = vmatpush.bf16.msra.mxu0 %v72
  %132 = vmatmul.bf16.gmra.mxu0 %v96
  %v133 = vpop.f32.mrf.mxu0
  %v134 = vadd.f32 %v32, %v133
  %v135 = vpop.f32.mrf.mxu0
  %136 = vdwg.mxu0
  %137 = vmatpush.bf16.msra.mxu0 0
  %138 = vmatpush.bf16.msra.mxu0 0
  %139 = vmatpush.bf16.msra.mxu0 0
  %140 = vmatpush.bf16.msra.mxu0 0
  %141 = vmatpush.bf16.msra.mxu0 0
  %142 = vmatpush.bf16.msra.mxu0 %v81
  %143 = vmatpush.bf16.msra.mxu0 %v77
  %144 = vmatpush.bf16.msra.mxu0 %v73
  %145 = vmatmul.bf16.gmra.mxu0 %v96
  %v146 = vpop.f32.mrf.mxu0
  %v147 = vadd.f32 %v32, %v146
  %v148 = vpop.f32.mrf.mxu0
  %149 = vdwg.mxu0
  %v150 = vmax.f32 %v108, 0.0
  %v151 = vmax.f32 %v121, 0.0
  %v152 = vmax.f32 %v134, 0.0
  %v153 = vmax.f32 %v147, 0.0
  %154 = vst [vmem:[%s3] sm:$0x3f] %v150
  %155 = vst [vmem:[%s3 + $0x8] sm:$0x3f] %v151
  %156 = vst [vmem:[%s3 + $0x10] sm:$0x3f] %v152
  %157 = vst [vmem:[%s3 + $0x18] sm:$0x3f] %v153
  // Predicated region
  $region14: #{autoencoder_forward.6} parent=0 // pred_check
    _
  $region15: #{autoencoder_forward.6} parent=0 // pred_check_branch
    %159 = sbr.rel (0) target = $region17
  $region16: #{autoencoder_forward.6} parent=0 // pred_region
    _
  $region17: #{autoencoder_forward.6} parent=0 // pred_fallthru
    _
  // Predicated region
  $region18: #{autoencoder_forward.6} parent=0 // pred_check
    _
  $region19: #{autoencoder_forward.6} parent=0 // pred_check_branch
    %161 = sbr.rel (0) target = $region21
  $region20: #{autoencoder_forward.6} parent=0 // pred_region
    _
  $region21: #{autoencoder_forward.6} parent=0 // pred_fallthru
    _

// kernel: autoencoder_forward.7
$region0: #{autoencoder_forward.7}
  #allocation0 [shape = 'u32[]', space=smem, size = 0x4, offset = 0x4, fixed_abs, tag = 'smem constant byte address 0x4 - core index']
  #allocation1 [shape = 'u32[72,128]{1,0:T(1,128)}', space=vmem, size = 0x9000, scoped, tag = 'internal scratch']
  %s0 = inlined_call_operand.vmem [shape: bf16[6,96], index: 0, kind: input, shape index: {}]
  %s1 = inlined_call_operand.vmem [shape: bf16[96,128], index: 1, kind: input, shape index: {}]
  %s2 = inlined_call_operand.vmem [shape: f32[6,1], index: 2, kind: input, shape index: {}]
  %s3 = inlined_call_operand.vmem [shape: f32[6,128], index: 3, kind: output, shape index: {}]
  %s4 = sld [smem:[#allocation0]]
  $region22: #{autoencoder_forward.7} parent=0
    _
  %s6 = ssub.s32 1, %s4
  %s7 = scalar_select 0, %s6, %s4
  // Predicated region
  $region2: #{autoencoder_forward.7} parent=0 // pred_check
    _
  $region3: #{autoencoder_forward.7} parent=0 // pred_check_branch
    %9 = sbr.rel (0) target = $region5
  $region4: #{autoencoder_forward.7} parent=0 // pred_region
    _
  $region5: #{autoencoder_forward.7} parent=0 // pred_fallthru
    _
  // Predicated region
  $region6: #{autoencoder_forward.7} parent=0 // pred_check
    _
  $region7: #{autoencoder_forward.7} parent=0 // pred_check_branch
    %11 = sbr.rel (0) target = $region9
  $region8: #{autoencoder_forward.7} parent=0 // pred_region
    _
  $region9: #{autoencoder_forward.7} parent=0 // pred_fallthru
    _
  // Predicated region
  $region10: #{autoencoder_forward.7} parent=0 // pred_check
    _
  $region11: #{autoencoder_forward.7} parent=0 // pred_check_branch
    %13 = sbr.rel (0) target = $region13
  $region12: #{autoencoder_forward.7} parent=0 // pred_region
    _
  $region13: #{autoencoder_forward.7} parent=0 // pred_fallthru
    _
  %v15 = vld [vmem:[%s0] sm:$0x7]
  %v16 = vld [vmem:[%s1] sm:$0xf]
  %v17 = vld [vmem:[%s1 + $0x4] sm:$0xf]
  %v18 = vld [vmem:[%s1 + $0x8] sm:$0xf]
  %v19 = vld [vmem:[%s1 + $0xc] sm:$0xf]
  %v20 = vld [vmem:[%s1 + $0x10] sm:$0xf]
  %v21 = vld [vmem:[%s1 + $0x14] sm:$0xf]
  %v22 = vld [vmem:[%s1 + $0x18] sm:$0xf]
  %v23 = vld [vmem:[%s1 + $0x1c] sm:$0xf]
  %v24 = vld [vmem:[%s1 + $0x20] sm:$0xf]
  %v25 = vld [vmem:[%s1 + $0x24] sm:$0xf]
  %v26 = vld [vmem:[%s1 + $0x28] sm:$0xf]
  %v27 = vld [vmem:[%s1 + $0x2c] sm:$0xf]
  %v28 = vld [vmem:[%s2] sm:$0x3f]
  %30 = vset.pattern.permute.xlu0 0
  %31 = vperm.xlu0 %30, %v28
  %v32 = vpop.permute.xlu0 %31
  %v46 = vunpack.c.l.b16 %v16
  %v47 = vunpack.c.l.b16 %v17
  %v48 = vunpack.c.l.b16 %v18
  %v49 = vunpack.c.l.b16 %v19
  %v50 = vunpack.c.l.b16 %v20
  %v51 = vunpack.c.l.b16 %v21
  %v52 = vunpack.c.l.b16 %v22
  %v53 = vunpack.c.l.b16 %v23
  %v54 = vunpack.c.l.b16 %v24
  %v55 = vunpack.c.l.b16 %v25
  %v56 = vunpack.c.l.b16 %v26
  %v57 = vunpack.c.l.b16 %v27
  %v58 = vpack.c.b16 %v47, %v46
  %v59 = vpack.c.b16 %v49, %v48
  %v60 = vpack.c.b16 %v51, %v50
  %v61 = vpack.c.b16 %v53, %v52
  %v62 = vpack.c.b16 %v55, %v54
  %v63 = vpack.c.b16 %v57, %v56
  %vm70 = vcmask 785408
  %v72 = vsel %vm70, %v15, 0
  %74 = vmatpush.bf16.msra.mxu0 0
  %75 = vmatpush.bf16.msra.mxu0 0
  %76 = vmatpush.bf16.msra.mxu0 %v63
  %77 = vmatpush.bf16.msra.mxu0 %v62
  %78 = vmatpush.bf16.msra.mxu0 %v61
  %79 = vmatpush.bf16.msra.mxu0 %v60
  %80 = vmatpush.bf16.msra.mxu0 %v59
  %81 = vmatpush.bf16.msra.mxu0 %v58
  %82 = vmatmul.bf16.gmra.mxu0 %v72
  %v83 = vpop.f32.mrf.mxu0
  %v84 = vadd.f32 %v32, %v83
  %v85 = vpop.f32.mrf.mxu0
  %86 = vdwg.mxu0
  %v87 = vmax.f32 %v84, 0.0
  %88 = vst [vmem:[%s3] sm:$0x3f] %v87
  // Predicated region
  $region14: #{autoencoder_forward.7} parent=0 // pred_check
    _
  $region15: #{autoencoder_forward.7} parent=0 // pred_check_branch
    %90 = sbr.rel (0) target = $region17
  $region16: #{autoencoder_forward.7} parent=0 // pred_region
    _
  $region17: #{autoencoder_forward.7} parent=0 // pred_fallthru
    _
  // Predicated region
  $region18: #{autoencoder_forward.7} parent=0 // pred_check
    _
  $region19: #{autoencoder_forward.7} parent=0 // pred_check_branch
    %92 = sbr.rel (0) target = $region21
  $region20: #{autoencoder_forward.7} parent=0 // pred_region
    _
  $region21: #{autoencoder_forward.7} parent=0 // pred_fallthru
    _

// kernel: autoencoder_forward.8
$region0: #{autoencoder_forward.8}
  #allocation0 [shape = 'u32[]', space=smem, size = 0x4, offset = 0x4, fixed_abs, tag = 'smem constant byte address 0x4 - core index']
  #allocation1 [shape = 'u32[72,128]{1,0:T(1,128)}', space=vmem, size = 0x9000, scoped, tag = 'internal scratch']
  %s0 = inlined_call_operand.vmem [shape: bf16[6,96], index: 0, kind: input, shape index: {}]
  %s1 = inlined_call_operand.vmem [shape: bf16[96,32], index: 1, kind: input, shape index: {}]
  %s2 = inlined_call_operand.vmem [shape: f32[6,1], index: 2, kind: input, shape index: {}]
  %s3 = inlined_call_operand.vmem [shape: f32[6,32], index: 3, kind: output, shape index: {}]
  %s4 = sld [smem:[#allocation0]]
  $region22: #{autoencoder_forward.8} parent=0
    _
  %s6 = ssub.s32 1, %s4
  %s7 = scalar_select 0, %s6, %s4
  // Predicated region
  $region2: #{autoencoder_forward.8} parent=0 // pred_check
    _
  $region3: #{autoencoder_forward.8} parent=0 // pred_check_branch
    %9 = sbr.rel (0) target = $region5
  $region4: #{autoencoder_forward.8} parent=0 // pred_region
    _
  $region5: #{autoencoder_forward.8} parent=0 // pred_fallthru
    _
  // Predicated region
  $region6: #{autoencoder_forward.8} parent=0 // pred_check
    _
  $region7: #{autoencoder_forward.8} parent=0 // pred_check_branch
    %11 = sbr.rel (0) target = $region9
  $region8: #{autoencoder_forward.8} parent=0 // pred_region
    _
  $region9: #{autoencoder_forward.8} parent=0 // pred_fallthru
    _
  // Predicated region
  $region10: #{autoencoder_forward.8} parent=0 // pred_check
    _
  $region11: #{autoencoder_forward.8} parent=0 // pred_check_branch
    %13 = sbr.rel (0) target = $region13
  $region12: #{autoencoder_forward.8} parent=0 // pred_region
    _
  $region13: #{autoencoder_forward.8} parent=0 // pred_fallthru
    _
  %v15 = vld [vmem:[%s0] sm:$0x7]
  %v16 = vld [vmem:[%s1] sm:$0xf]
  %v17 = vld [vmem:[%s1 + $0x4] sm:$0xf]
  %v18 = vld [vmem:[%s1 + $0x8] sm:$0xf]
  %v19 = vld [vmem:[%s1 + $0xc] sm:$0xf]
  %v20 = vld [vmem:[%s1 + $0x10] sm:$0xf]
  %v21 = vld [vmem:[%s1 + $0x14] sm:$0xf]
  %v22 = vld [vmem:[%s1 + $0x18] sm:$0xf]
  %v23 = vld [vmem:[%s1 + $0x1c] sm:$0xf]
  %v24 = vld [vmem:[%s1 + $0x20] sm:$0xf]
  %v25 = vld [vmem:[%s1 + $0x24] sm:$0xf]
  %v26 = vld [vmem:[%s1 + $0x28] sm:$0xf]
  %v27 = vld [vmem:[%s1 + $0x2c] sm:$0xf]
  %v28 = vld [vmem:[%s2] sm:$0x3f]
  %30 = vset.pattern.permute.xlu0 0
  %31 = vperm.xlu0 %30, %v28
  %v32 = vpop.permute.xlu0 %31
  %v46 = vunpack.c.l.b16 %v16
  %v47 = vunpack.c.l.b16 %v17
  %v48 = vunpack.c.l.b16 %v18
  %v49 = vunpack.c.l.b16 %v19
  %v50 = vunpack.c.l.b16 %v20
  %v51 = vunpack.c.l.b16 %v21
  %v52 = vunpack.c.l.b16 %v22
  %v53 = vunpack.c.l.b16 %v23
  %v54 = vunpack.c.l.b16 %v24
  %v55 = vunpack.c.l.b16 %v25
  %v56 = vunpack.c.l.b16 %v26
  %v57 = vunpack.c.l.b16 %v27
  %v58 = vpack.c.b16 %v47, %v46
  %v59 = vpack.c.b16 %v49, %v48
  %v60 = vpack.c.b16 %v51, %v50
  %v61 = vpack.c.b16 %v53, %v52
  %v62 = vpack.c.b16 %v55, %v54
  %v63 = vpack.c.b16 %v57, %v56
  %vm70 = vcmask 785408
  %v72 = vsel %vm70, %v15, 0
  %74 = vmatpush.bf16.msra.mxu0 0
  %75 = vmatpush.bf16.msra.mxu0 0
  %76 = vmatpush.bf16.msra.mxu0 %v63
  %77 = vmatpush.bf16.msra.mxu0 %v62
  %78 = vmatpush.bf16.msra.mxu0 %v61
  %79 = vmatpush.bf16.msra.mxu0 %v60
  %80 = vmatpush.bf16.msra.mxu0 %v59
  %81 = vmatpush.bf16.msra.mxu0 %v58
  %82 = vmatmul.bf16.gmra.mxu0 %v72
  %v83 = vpop.f32.mrf.mxu0
  %v84 = vadd.f32 %v32, %v83
  %v85 = vpop.f32.mrf.mxu0
  %86 = vdwg.mxu0
  %v87 = vmax.f32 %v84, 0.0
  %vm88 = vcmask 259072
  %89 = vst.msk [vmem:[%s3] sm:$0x3f] %vm88, %v87
  // Predicated region
  $region14: #{autoencoder_forward.8} parent=0 // pred_check
    _
  $region15: #{autoencoder_forward.8} parent=0 // pred_check_branch
    %91 = sbr.rel (0) target = $region17
  $region16: #{autoencoder_forward.8} parent=0 // pred_region
    _
  $region17: #{autoencoder_forward.8} parent=0 // pred_fallthru
    _
  // Predicated region
  $region18: #{autoencoder_forward.8} parent=0 // pred_check
    _
  $region19: #{autoencoder_forward.8} parent=0 // pred_check_branch
    %93 = sbr.rel (0) target = $region21
  $region20: #{autoencoder_forward.8} parent=0 // pred_region
    _
  $region21: #{autoencoder_forward.8} parent=0 // pred_fallthru
    _

// kernel: autoencoder_forward.9
$region0: #{autoencoder_forward.9}
  #allocation0 [shape = 'u32[]', space=smem, size = 0x4, offset = 0x4, fixed_abs, tag = 'smem constant byte address 0x4 - core index']
  #allocation1 [shape = 'u32[72,128]{1,0:T(1,128)}', space=vmem, size = 0x9000, scoped, tag = 'internal scratch']
  %s0 = inlined_call_operand.vmem [shape: bf16[24,54], index: 0, kind: input, shape index: {}]
  %s1 = inlined_call_operand.vmem [shape: bf16[54,32], index: 1, kind: input, shape index: {}]
  %s2 = inlined_call_operand.vmem [shape: f32[24,1], index: 2, kind: input, shape index: {}]
  %s3 = inlined_call_operand.vmem [shape: f32[24,32], index: 3, kind: output, shape index: {}]
  %s4 = sld [smem:[#allocation0]]
  $region22: #{autoencoder_forward.9} parent=0
    _
  %s6 = ssub.s32 1, %s4
  %s7 = scalar_select 0, %s6, %s4
  // Predicated region
  $region2: #{autoencoder_forward.9} parent=0 // pred_check
    _
  $region3: #{autoencoder_forward.9} parent=0 // pred_check_branch
    %9 = sbr.rel (0) target = $region5
  $region4: #{autoencoder_forward.9} parent=0 // pred_region
    _
  $region5: #{autoencoder_forward.9} parent=0 // pred_fallthru
    _
  // Predicated region
  $region6: #{autoencoder_forward.9} parent=0 // pred_check
    _
  $region7: #{autoencoder_forward.9} parent=0 // pred_check_branch
    %11 = sbr.rel (0) target = $region9
  $region8: #{autoencoder_forward.9} parent=0 // pred_region
    _
  $region9: #{autoencoder_forward.9} parent=0 // pred_fallthru
    _
  // Predicated region
  $region10: #{autoencoder_forward.9} parent=0 // pred_check
    _
  $region11: #{autoencoder_forward.9} parent=0 // pred_check_branch
    %13 = sbr.rel (0) target = $region13
  $region12: #{autoencoder_forward.9} parent=0 // pred_region
    _
  $region13: #{autoencoder_forward.9} parent=0 // pred_fallthru
    _
  %v15 = vld [vmem:[%s0] sm:$0xf]
  %v16 = vld [vmem:[%s0 + $0x4] sm:$0xf]
  %v17 = vld [vmem:[%s0 + $0x8] sm:$0xf]
  %v18 = vld [vmem:[%s1] sm:$0xf]
  %v19 = vld [vmem:[%s1 + $0x4] sm:$0xf]
  %v20 = vld [vmem:[%s1 + $0x8] sm:$0xf]
  %v21 = vld [vmem:[%s1 + $0xc] sm:$0xf]
  %v22 = vld [vmem:[%s1 + $0x10] sm:$0xf]
  %v23 = vld [vmem:[%s1 + $0x14] sm:$0xf]
  %v24 = vld [vmem:[%s1 + $0x18] sm:$0x7]
  %v25 = vld [vmem:[%s2] sm:$0xff]
  %v26 = vld [vmem:[%s2 + $0x8] sm:$0xff]
  %v27 = vld [vmem:[%s2 + $0x10] sm:$0xff]
  %29 = vset.pattern.permute.xlu0 0
  %30 = vperm.xlu0 %29, %v25
  %v31 = vpop.permute.xlu0 %30
  %34 = vset.pattern.permute.xlu0 0
  %35 = vperm.xlu0 %34, %v26
  %v36 = vpop.permute.xlu0 %35
  %39 = vset.pattern.permute.xlu0 0
  %40 = vperm.xlu0 %39, %v27
  %v41 = vpop.permute.xlu0 %40
  %v46 = vunpack.c.l.b16 %v15
  %v47 = vunpack.c.l.b16 %v16
  %v48 = vunpack.c.l.b16 %v17
  %v49 = vpack.c.b16 %v47, %v46
  %v50 = vpack.c.b16 %v48, %v48
  %v58 = vunpack.c.l.b16 %v18
  %v59 = vunpack.c.l.b16 %v19
  %v60 = vunpack.c.l.b16 %v20
  %v61 = vunpack.c.l.b16 %v21
  %v62 = vunpack.c.l.b16 %v22
  %v63 = vunpack.c.l.b16 %v23
  %v64 = vunpack.c.l.b16 %v24
  %v65 = vpack.c.b16 %v59, %v58
  %v66 = vpack.c.b16 %v61, %v60
  %v67 = vpack.c.b16 %v63, %v62
  %v68 = vpack.c.b16 %v64, %v64
  %vm72 = vcmask 441344
  %v74 = vsel %vm72, %v49, 0
  %v77 = vsel %vm72, %v50, 0
  %vm79 = vcmask 1042432
  %v81 = vsel %vm79, %v68, 0
  %83 = vmatpush.bf16.msra.mxu0 0
  %84 = vmatpush.bf16.msra.mxu0 0
  %85 = vmatpush.bf16.msra.mxu0 0
  %86 = vmatpush.bf16.msra.mxu0 0
  %87 = vmatpush.bf16.msra.mxu0 %v81
  %88 = vmatpush.bf16.msra.mxu0 %v67
  %89 = vmatpush.bf16.msra.mxu0 %v66
  %90 = vmatpush.bf16.msra.mxu0 %v65
  %91 = vmatmul.bf16.gmra.mxu0 %v74
  %v92 = vpop.f32.mrf.mxu0
  %v93 = vadd.f32 %v31, %v92
  %v94 = vpop.f32.mrf.mxu0
  %v95 = vadd.f32 %v36, %v94
  %96 = vmatmul.bf16.gmra.mxu0 %v77
  %v97 = vpop.f32.mrf.mxu0
  %v98 = vadd.f32 %v41, %v97
  %v99 = vpop.f32.mrf.mxu0
  %100 = vdwg.mxu0
  %v101 = vmax.f32 %v93, 0.0
  %v102 = vmax.f32 %v95, 0.0
  %v103 = vmax.f32 %v98, 0.0
  %vm104 = vcmask 261120
  %105 = vst.msk [vmem:[%s3] sm:$0xff] %vm104, %v101
  %106 = vst.msk [vmem:[%s3 + $0x8] sm:$0xff] %vm104, %v102
  %107 = vst.msk [vmem:[%s3 + $0x10] sm:$0xff] %vm104, %v103
  // Predicated region
  $region14: #{autoencoder_forward.9} parent=0 // pred_check
    _
  $region15: #{autoencoder_forward.9} parent=0 // pred_check_branch
    %109 = sbr.rel (0) target = $region17
  $region16: #{autoencoder_forward.9} parent=0 // pred_region
    _
  $region17: #{autoencoder_forward.9} parent=0 // pred_fallthru
    _
  // Predicated region
  $region18: #{autoencoder_forward.9} parent=0 // pred_check
    _
  $region19: #{autoencoder_forward.9} parent=0 // pred_check_branch
    %111 = sbr.rel (0) target = $region21
  $region20: #{autoencoder_forward.9} parent=0 // pred_region
    _
  $region21: #{autoencoder_forward.9} parent=0 // pred_fallthru
    _

// kernel: autoencoder_forward.10
$region0: #{autoencoder_forward.10}
  #allocation0 [shape = 'u32[]', space=smem, size = 0x4, offset = 0x4, fixed_abs, tag = 'smem constant byte address 0x4 - core index']
  #allocation1 [shape = 'u32[72,128]{1,0:T(1,128)}', space=vmem, size = 0x9000, scoped, tag = 'internal scratch']
  %s0 = inlined_call_operand.vmem [shape: bf16[24,54], index: 0, kind: input, shape index: {}]
  %s1 = inlined_call_operand.vmem [shape: bf16[54,128], index: 1, kind: input, shape index: {}]
  %s2 = inlined_call_operand.vmem [shape: f32[24,1], index: 2, kind: input, shape index: {}]
  %s3 = inlined_call_operand.vmem [shape: f32[24,128], index: 3, kind: output, shape index: {}]
  %s4 = sld [smem:[#allocation0]]
  $region22: #{autoencoder_forward.10} parent=0
    _
  %s6 = ssub.s32 1, %s4
  %s7 = scalar_select 0, %s6, %s4
  // Predicated region
  $region2: #{autoencoder_forward.10} parent=0 // pred_check
    _
  $region3: #{autoencoder_forward.10} parent=0 // pred_check_branch
    %9 = sbr.rel (0) target = $region5
  $region4: #{autoencoder_forward.10} parent=0 // pred_region
    _
  $region5: #{autoencoder_forward.10} parent=0 // pred_fallthru
    _
  // Predicated region
  $region6: #{autoencoder_forward.10} parent=0 // pred_check
    _
  $region7: #{autoencoder_forward.10} parent=0 // pred_check_branch
    %11 = sbr.rel (0) target = $region9
  $region8: #{autoencoder_forward.10} parent=0 // pred_region
    _
  $region9: #{autoencoder_forward.10} parent=0 // pred_fallthru
    _
  // Predicated region
  $region10: #{autoencoder_forward.10} parent=0 // pred_check
    _
  $region11: #{autoencoder_forward.10} parent=0 // pred_check_branch
    %13 = sbr.rel (0) target = $region13
  $region12: #{autoencoder_forward.10} parent=0 // pred_region
    _
  $region13: #{autoencoder_forward.10} parent=0 // pred_fallthru
    _
  %v15 = vld [vmem:[%s0] sm:$0xf]
  %v16 = vld [vmem:[%s0 + $0x4] sm:$0xf]
  %v17 = vld [vmem:[%s0 + $0x8] sm:$0xf]
  %v18 = vld [vmem:[%s1] sm:$0xf]
  %v19 = vld [vmem:[%s1 + $0x4] sm:$0xf]
  %v20 = vld [vmem:[%s1 + $0x8] sm:$0xf]
  %v21 = vld [vmem:[%s1 + $0xc] sm:$0xf]
  %v22 = vld [vmem:[%s1 + $0x10] sm:$0xf]
  %v23 = vld [vmem:[%s1 + $0x14] sm:$0xf]
  %v24 = vld [vmem:[%s1 + $0x18] sm:$0x7]
  %v25 = vld [vmem:[%s2] sm:$0xff]
  %v26 = vld [vmem:[%s2 + $0x8] sm:$0xff]
  %v27 = vld [vmem:[%s2 + $0x10] sm:$0xff]
  %29 = vset.pattern.permute.xlu0 0
  %30 = vperm.xlu0 %29, %v25
  %v31 = vpop.permute.xlu0 %30
  %34 = vset.pattern.permute.xlu0 0
  %35 = vperm.xlu0 %34, %v26
  %v36 = vpop.permute.xlu0 %35
  %39 = vset.pattern.permute.xlu0 0
  %40 = vperm.xlu0 %39, %v27
  %v41 = vpop.permute.xlu0 %40
  %v46 = vunpack.c.l.b16 %v15
  %v47 = vunpack.c.l.b16 %v16
  %v48 = vunpack.c.l.b16 %v17
  %v49 = vpack.c.b16 %v47, %v46
  %v50 = vpack.c.b16 %v48, %v48
  %v58 = vunpack.c.l.b16 %v18
  %v59 = vunpack.c.l.b16 %v19
  %v60 = vunpack.c.l.b16 %v20
  %v61 = vunpack.c.l.b16 %v21
  %v62 = vunpack.c.l.b16 %v22
  %v63 = vunpack.c.l.b16 %v23
  %v64 = vunpack.c.l.b16 %v24
  %v65 = vpack.c.b16 %v59, %v58
  %v66 = vpack.c.b16 %v61, %v60
  %v67 = vpack.c.b16 %v63, %v62
  %v68 = vpack.c.b16 %v64, %v64
  %vm72 = vcmask 441344
  %v74 = vsel %vm72, %v49, 0
  %v77 = vsel %vm72, %v50, 0
  %vm79 = vcmask 1042432
  %v81 = vsel %vm79, %v68, 0
  %83 = vmatpush.bf16.msra.mxu0 0
  %84 = vmatpush.bf16.msra.mxu0 0
  %85 = vmatpush.bf16.msra.mxu0 0
  %86 = vmatpush.bf16.msra.mxu0 0
  %87 = vmatpush.bf16.msra.mxu0 %v81
  %88 = vmatpush.bf16.msra.mxu0 %v67
  %89 = vmatpush.bf16.msra.mxu0 %v66
  %90 = vmatpush.bf16.msra.mxu0 %v65
  %91 = vmatmul.bf16.gmra.mxu0 %v74
  %v92 = vpop.f32.mrf.mxu0
  %v93 = vadd.f32 %v31, %v92
  %v94 = vpop.f32.mrf.mxu0
  %v95 = vadd.f32 %v36, %v94
  %96 = vmatmul.bf16.gmra.mxu0 %v77
  %v97 = vpop.f32.mrf.mxu0
  %v98 = vadd.f32 %v41, %v97
  %v99 = vpop.f32.mrf.mxu0
  %100 = vdwg.mxu0
  %v101 = vmax.f32 %v93, 0.0
  %v102 = vmax.f32 %v95, 0.0
  %v103 = vmax.f32 %v98, 0.0
  %104 = vst [vmem:[%s3] sm:$0xff] %v101
  %105 = vst [vmem:[%s3 + $0x8] sm:$0xff] %v102
  %106 = vst [vmem:[%s3 + $0x10] sm:$0xff] %v103
  // Predicated region
  $region14: #{autoencoder_forward.10} parent=0 // pred_check
    _
  $region15: #{autoencoder_forward.10} parent=0 // pred_check_branch
    %108 = sbr.rel (0) target = $region17
  $region16: #{autoencoder_forward.10} parent=0 // pred_region
    _
  $region17: #{autoencoder_forward.10} parent=0 // pred_fallthru
    _
  // Predicated region
  $region18: #{autoencoder_forward.10} parent=0 // pred_check
    _
  $region19: #{autoencoder_forward.10} parent=0 // pred_check_branch
    %110 = sbr.rel (0) target = $region21
  $region20: #{autoencoder_forward.10} parent=0 // pred_region
    _
  $region21: #{autoencoder_forward.10} parent=0 // pred_fallthru
    _

// kernel: autoencoder_forward.11
$region0: #{autoencoder_forward.11}
  #allocation0 [shape = 'u32[]', space=smem, size = 0x4, offset = 0x4, fixed_abs, tag = 'smem constant byte address 0x4 - core index']
  #allocation1 [shape = 'u32[72,128]{1,0:T(1,128)}', space=vmem, size = 0x9000, scoped, tag = 'internal scratch']
  %s0 = inlined_call_operand.vmem [shape: bf16[12,54], index: 0, kind: input, shape index: {}]
  %s1 = inlined_call_operand.vmem [shape: bf16[54,512], index: 1, kind: input, shape index: {}]
  %s2 = inlined_call_operand.vmem [shape: f32[12,1], index: 2, kind: input, shape index: {}]
  %s3 = inlined_call_operand.vmem [shape: f32[12,512], index: 3, kind: output, shape index: {}]
  %s4 = sld [smem:[#allocation0]]
  $region22: #{autoencoder_forward.11} parent=0
    _
  %s6 = ssub.s32 1, %s4
  %s7 = scalar_select 0, %s6, %s4
  // Predicated region
  $region2: #{autoencoder_forward.11} parent=0 // pred_check
    _
  $region3: #{autoencoder_forward.11} parent=0 // pred_check_branch
    %9 = sbr.rel (0) target = $region5
  $region4: #{autoencoder_forward.11} parent=0 // pred_region
    _
  $region5: #{autoencoder_forward.11} parent=0 // pred_fallthru
    _
  // Predicated region
  $region6: #{autoencoder_forward.11} parent=0 // pred_check
    _
  $region7: #{autoencoder_forward.11} parent=0 // pred_check_branch
    %11 = sbr.rel (0) target = $region9
  $region8: #{autoencoder_forward.11} parent=0 // pred_region
    _
  $region9: #{autoencoder_forward.11} parent=0 // pred_fallthru
    _
  // Predicated region
  $region10: #{autoencoder_forward.11} parent=0 // pred_check
    _
  $region11: #{autoencoder_forward.11} parent=0 // pred_check_branch
    %13 = sbr.rel (0) target = $region13
  $region12: #{autoencoder_forward.11} parent=0 // pred_region
    _
  $region13: #{autoencoder_forward.11} parent=0 // pred_fallthru
    _
  %v15 = vld [vmem:[%s0] sm:$0xf]
  %v16 = vld [vmem:[%s0 + $0x4] sm:$0x3]
  %v17 = vld [vmem:[%s1] sm:$0xff]
  %v18 = vld [vmem:[%s1 + $0x8] sm:$0xff]
  %v19 = vld [vmem:[%s1 + $0x10] sm:$0xff]
  %v20 = vld [vmem:[%s1 + $0x18] sm:$0xff]
  %v21 = vld [vmem:[%s1 + $0x20] sm:$0xff]
  %v22 = vld [vmem:[%s1 + $0x28] sm:$0xff]
  %v23 = vld [vmem:[%s1 + $0x30] sm:$0xff]
  %v24 = vld [vmem:[%s1 + $0x38] sm:$0xff]
  %v25 = vld [vmem:[%s1 + $0x40] sm:$0xff]
  %v26 = vld [vmem:[%s1 + $0x48] sm:$0xff]
  %v27 = vld [vmem:[%s1 + $0x50] sm:$0xff]
  %v28 = vld [vmem:[%s1 + $0x58] sm:$0xff]
  %v29 = vld [vmem:[%s1 + $0x60] sm:$0x77]
  %v30 = vld [vmem:[%s1 + $0x68] sm:$0x77]
  %v31 = vld [vmem:[%s2] sm:$0xff]
  %v32 = vld [vmem:[%s2 + $0x8] sm:$0xf]
  %34 = vset.pattern.permute.xlu0 0
  %35 = vperm.xlu0 %34, %v31
  %v36 = vpop.permute.xlu0 %35
  %39 = vset.pattern.permute.xlu0 0
  %40 = vperm.xlu0 %39, %v32
  %v41 = vpop.permute.xlu0 %40
  %v45 = vunpack.c.l.b16 %v15
  %v46 = vunpack.c.l.b16 %v16
  %v47 = vpack.c.b16 %v46, %v45
  %v62 = vunpack.c.l.b16 %v17
  %v63 = vunpack.c.h.b16 %v17
  %v64 = vunpack.c.l.b16 %v18
  %v65 = vunpack.c.h.b16 %v18
  %v66 = vunpack.c.l.b16 %v19
  %v67 = vunpack.c.h.b16 %v19
  %v68 = vunpack.c.l.b16 %v20
  %v69 = vunpack.c.h.b16 %v20
  %v70 = vunpack.c.l.b16 %v21
  %v71 = vunpack.c.h.b16 %v21
  %v72 = vunpack.c.l.b16 %v22
  %v73 = vunpack.c.h.b16 %v22
  %v74 = vunpack.c.l.b16 %v23
  %v75 = vunpack.c.h.b16 %v23
  %v76 = vunpack.c.l.b16 %v24
  %v77 = vunpack.c.h.b16 %v24
  %v78 = vunpack.c.l.b16 %v25
  %v79 = vunpack.c.h.b16 %v25
  %v80 = vunpack.c.l.b16 %v26
  %v81 = vunpack.c.h.b16 %v26
  %v82 = vunpack.c.l.b16 %v27
  %v83 = vunpack.c.h.b16 %v27
  %v84 = vunpack.c.l.b16 %v28
  %v85 = vunpack.c.h.b16 %v28
  %v86 = vunpack.c.l.b16 %v29
  %v87 = vunpack.c.h.b16 %v29
  %v88 = vunpack.c.l.b16 %v30
  %v89 = vunpack.c.h.b16 %v30
  %v90 = vpack.c.b16 %v66, %v62
  %v91 = vpack.c.b16 %v67, %v63
  %v92 = vpack.c.b16 %v68, %v64
  %v93 = vpack.c.b16 %v69, %v65
  %v94 = vpack.c.b16 %v74, %v70
  %v95 = vpack.c.b16 %v75, %v71
  %v96 = vpack.c.b16 %v76, %v72
  %v97 = vpack.c.b16 %v77, %v73
  %v98 = vpack.c.b16 %v82, %v78
  %v99 = vpack.c.b16 %v83, %v79
  %v100 = vpack.c.b16 %v84, %v80
  %v101 = vpack.c.b16 %v85, %v81
  %v102 = vpack.c.b16 %v86, %v86
  %v103 = vpack.c.b16 %v87, %v87
  %v104 = vpack.c.b16 %v88, %v88
  %v105 = vpack.c.b16 %v89, %v89
  %vm118 = vcmask 441344
  %v120 = vsel %vm118, %v47, 0
  %vm122 = vcmask 1042432
  %v124 = vsel %vm122, %v102, 0
  %v127 = vsel %vm122, %v103, 0
  %v130 = vsel %vm122, %v104, 0
  %v133 = vsel %vm122, %v105, 0
  %135 = vmatpush.bf16.msra.mxu0 0
  %136 = vmatpush.bf16.msra.mxu0 0
  %137 = vmatpush.bf16.msra.mxu0 0
  %138 = vmatpush.bf16.msra.mxu0 0
  %139 = vmatpush.bf16.msra.mxu0 %v124
  %140 = vmatpush.bf16.msra.mxu0 %v98
  %141 = vmatpush.bf16.msra.mxu0 %v94
  %142 = vmatpush.bf16.msra.mxu0 %v90
  %143 = vmatmul.bf16.gmra.mxu0 %v120
  %v144 = vpop.f32.mrf.mxu0
  %v145 = vadd.f32 %v36, %v144
  %v146 = vpop.f32.mrf.mxu0
  %v147 = vadd.f32 %v41, %v146
  %148 = vdwg.mxu0
  %149 = vmatpush.bf16.msra.mxu0 0
  %150 = vmatpush.bf16.msra.mxu0 0
  %151 = vmatpush.bf16.msra.mxu0 0
  %152 = vmatpush.bf16.msra.mxu0 0
  %153 = vmatpush.bf16.msra.mxu0 %v127
  %154 = vmatpush.bf16.msra.mxu0 %v99
  %155 = vmatpush.bf16.msra.mxu0 %v95
  %156 = vmatpush.bf16.msra.mxu0 %v91
  %157 = vmatmul.bf16.gmra.mxu0 %v120
  %v158 = vpop.f32.mrf.mxu0
  %v159 = vadd.f32 %v36, %v158
  %v160 = vpop.f32.mrf.mxu0
  %v161 = vadd.f32 %v41, %v160
  %162 = vdwg.mxu0
  %163 = vmatpush.bf16.msra.mxu0 0
  %164 = vmatpush.bf16.msra.mxu0 0
  %165 = vmatpush.bf16.msra.mxu0 0
  %166 = vmatpush.bf16.msra.mxu0 0
  %167 = vmatpush.bf16.msra.mxu0 %v130
  %168 = vmatpush.bf16.msra.mxu0 %v100
  %169 = vmatpush.bf16.msra.mxu0 %v96
  %170 = vmatpush.bf16.msra.mxu0 %v92
  %171 = vmatmul.bf16.gmra.mxu0 %v120
  %v172 = vpop.f32.mrf.mxu0
  %v173 = vadd.f32 %v36, %v172
  %v174 = vpop.f32.mrf.mxu0
  %v175 = vadd.f32 %v41, %v174
  %176 = vdwg.mxu0
  %177 = vmatpush.bf16.msra.mxu0 0
  %178 = vmatpush.bf16.msra.mxu0 0
  %179 = vmatpush.bf16.msra.mxu0 0
  %180 = vmatpush.bf16.msra.mxu0 0
  %181 = vmatpush.bf16.msra.mxu0 %v133
  %182 = vmatpush.bf16.msra.mxu0 %v101
  %183 = vmatpush.bf16.msra.mxu0 %v97
  %184 = vmatpush.bf16.msra.mxu0 %v93
  %185 = vmatmul.bf16.gmra.mxu0 %v120
  %v186 = vpop.f32.mrf.mxu0
  %v187 = vadd.f32 %v36, %v186
  %v188 = vpop.f32.mrf.mxu0
  %v189 = vadd.f32 %v41, %v188
  %190 = vdwg.mxu0
  %v191 = vxor.u32 %v145, 2147483648
  %v192 = vxor.u32 %v159, 2147483648
  %v193 = vxor.u32 %v173, 2147483648
  %v194 = vxor.u32 %v187, 2147483648
  %v195 = vxor.u32 %v147, 2147483648
  %v196 = vxor.u32 %v161, 2147483648
  %v197 = vxor.u32 %v175, 2147483648
  %v198 = vxor.u32 %v189, 2147483648
  %v199 = vmul.f32 %v191, 1.442695
  %v200 = vpow.pop %v199
  %v201 = vmul.f32 %v192, 1.442695
  %v202 = vpow.pop %v201
  %v203 = vmul.f32 %v193, 1.442695
  %v204 = vpow.pop %v203
  %v205 = vmul.f32 %v194, 1.442695
  %v206 = vpow.pop %v205
  %v207 = vmul.f32 %v195, 1.442695
  %v208 = vpow.pop %v207
  %v209 = vmul.f32 %v196, 1.442695
  %v210 = vpow.pop %v209
  %v211 = vmul.f32 %v197, 1.442695
  %v212 = vpow.pop %v211
  %v213 = vmul.f32 %v198, 1.442695
  %v214 = vpow.pop %v213
  %v215 = vadd.f32 %v200, 1.0
  %v216 = vadd.f32 %v202, 1.0
  %v217 = vadd.f32 %v204, 1.0
  %v218 = vadd.f32 %v206, 1.0
  %v219 = vadd.f32 %v208, 1.0
  %v220 = vadd.f32 %v210, 1.0
  %v221 = vadd.f32 %v212, 1.0
  %v222 = vadd.f32 %v214, 1.0
  %v223 = vrcp.pop %v215
  %v224 = vmul.f32 %v215, %v223
  %v225 = vsub.f32 1.0, %v224
  %v226 = vmul.f32 %v223, %v225
  %v227 = vadd.f32 %v223, %v226
  %vm228 = vweird.f32 %v215
  %vm229 = vweird.f32 %v223
  %vm230 = vmor %vm228, %vm229
  %v231 = vsel %vm230, %v223, %v227
  %v232 = vand.u32 2147483647, %v215
  %vm233 = vcmp.eq.f32.partialorder %v232, 8.507059e+37
  %v234 = vand.u32 %v215, 2147483648
  %v235 = vor.u32 1.1754944e-38, %v234
  %v236 = vsel %vm233, %v235, %v231
  %v237 = vmul.f32 1.0, %v236
  %v238 = vrcp.pop %v216
  %v239 = vmul.f32 %v216, %v238
  %v240 = vsub.f32 1.0, %v239
  %v241 = vmul.f32 %v238, %v240
  %v242 = vadd.f32 %v238, %v241
  %vm243 = vweird.f32 %v216
  %vm244 = vweird.f32 %v238
  %vm245 = vmor %vm243, %vm244
  %v246 = vsel %vm245, %v238, %v242
  %v247 = vand.u32 2147483647, %v216
  %vm248 = vcmp.eq.f32.partialorder %v247, 8.507059e+37
  %v249 = vand.u32 %v216, 2147483648
  %v250 = vor.u32 1.1754944e-38, %v249
  %v251 = vsel %vm248, %v250, %v246
  %v252 = vmul.f32 1.0, %v251
  %v253 = vrcp.pop %v217
  %v254 = vmul.f32 %v217, %v253
  %v255 = vsub.f32 1.0, %v254
  %v256 = vmul.f32 %v253, %v255
  %v257 = vadd.f32 %v253, %v256
  %vm258 = vweird.f32 %v217
  %vm259 = vweird.f32 %v253
  %vm260 = vmor %vm258, %vm259
  %v261 = vsel %vm260, %v253, %v257
  %v262 = vand.u32 2147483647, %v217
  %vm263 = vcmp.eq.f32.partialorder %v262, 8.507059e+37
  %v264 = vand.u32 %v217, 2147483648
  %v265 = vor.u32 1.1754944e-38, %v264
  %v266 = vsel %vm263, %v265, %v261
  %v267 = vmul.f32 1.0, %v266
  %v268 = vrcp.pop %v218
  %v269 = vmul.f32 %v218, %v268
  %v270 = vsub.f32 1.0, %v269
  %v271 = vmul.f32 %v268, %v270
  %v272 = vadd.f32 %v268, %v271
  %vm273 = vweird.f32 %v218
  %vm274 = vweird.f32 %v268
  %vm275 = vmor %vm273, %vm274
  %v276 = vsel %vm275, %v268, %v272
  %v277 = vand.u32 2147483647, %v218
  %vm278 = vcmp.eq.f32.partialorder %v277, 8.507059e+37
  %v279 = vand.u32 %v218, 2147483648
  %v280 = vor.u32 1.1754944e-38, %v279
  %v281 = vsel %vm278, %v280, %v276
  %v282 = vmul.f32 1.0, %v281
  %v283 = vrcp.pop %v219
  %v284 = vmul.f32 %v219, %v283
  %v285 = vsub.f32 1.0, %v284
  %v286 = vmul.f32 %v283, %v285
  %v287 = vadd.f32 %v283, %v286
  %vm288 = vweird.f32 %v219
  %vm289 = vweird.f32 %v283
  %vm290 = vmor %vm288, %vm289
  %v291 = vsel %vm290, %v283, %v287
  %v292 = vand.u32 2147483647, %v219
  %vm293 = vcmp.eq.f32.partialorder %v292, 8.507059e+37
  %v294 = vand.u32 %v219, 2147483648
  %v295 = vor.u32 1.1754944e-38, %v294
  %v296 = vsel %vm293, %v295, %v291
  %v297 = vmul.f32 1.0, %v296
  %v298 = vrcp.pop %v220
  %v299 = vmul.f32 %v220, %v298
  %v300 = vsub.f32 1.0, %v299
  %v301 = vmul.f32 %v298, %v300
  %v302 = vadd.f32 %v298, %v301
  %vm303 = vweird.f32 %v220
  %vm304 = vweird.f32 %v298
  %vm305 = vmor %vm303, %vm304
  %v306 = vsel %vm305, %v298, %v302
  %v307 = vand.u32 2147483647, %v220
  %vm308 = vcmp.eq.f32.partialorder %v307, 8.507059e+37
  %v309 = vand.u32 %v220, 2147483648
  %v310 = vor.u32 1.1754944e-38, %v309
  %v311 = vsel %vm308, %v310, %v306
  %v312 = vmul.f32 1.0, %v311
  %v313 = vrcp.pop %v221
  %v314 = vmul.f32 %v221, %v313
  %v315 = vsub.f32 1.0, %v314
  %v316 = vmul.f32 %v313, %v315
  %v317 = vadd.f32 %v313, %v316
  %vm318 = vweird.f32 %v221
  %vm319 = vweird.f32 %v313
  %vm320 = vmor %vm318, %vm319
  %v321 = vsel %vm320, %v313, %v317
  %v322 = vand.u32 2147483647, %v221
  %vm323 = vcmp.eq.f32.partialorder %v322, 8.507059e+37
  %v324 = vand.u32 %v221, 2147483648
  %v325 = vor.u32 1.1754944e-38, %v324
  %v326 = vsel %vm323, %v325, %v321
  %v327 = vmul.f32 1.0, %v326
  %v328 = vrcp.pop %v222
  %v329 = vmul.f32 %v222, %v328
  %v330 = vsub.f32 1.0, %v329
  %v331 = vmul.f32 %v328, %v330
  %v332 = vadd.f32 %v328, %v331
  %vm333 = vweird.f32 %v222
  %vm334 = vweird.f32 %v328
  %vm335 = vmor %vm333, %vm334
  %v336 = vsel %vm335, %v328, %v332
  %v337 = vand.u32 2147483647, %v222
  %vm338 = vcmp.eq.f32.partialorder %v337, 8.507059e+37
  %v339 = vand.u32 %v222, 2147483648
  %v340 = vor.u32 1.1754944e-38, %v339
  %v341 = vsel %vm338, %v340, %v336
  %v342 = vmul.f32 1.0, %v341
  %343 = vst [vmem:[%s3] sm:$0xff] %v237
  %344 = vst [vmem:[%s3 + $0x8] sm:$0xff] %v252
  %345 = vst [vmem:[%s3 + $0x10] sm:$0xff] %v267
  %346 = vst [vmem:[%s3 + $0x18] sm:$0xff] %v282
  %347 = vst [vmem:[%s3 + $0x20] sm:$0xf] %v297
  %348 = vst [vmem:[%s3 + $0x28] sm:$0xf] %v312
  %349 = vst [vmem:[%s3 + $0x30] sm:$0xf] %v327
  %350 = vst [vmem:[%s3 + $0x38] sm:$0xf] %v342
  // Predicated region
  $region14: #{autoencoder_forward.11} parent=0 // pred_check
    _
  $region15: #{autoencoder_forward.11} parent=0 // pred_check_branch
    %352 = sbr.rel (0) target = $region17
  $region16: #{autoencoder_forward.11} parent=0 // pred_region
    _
  $region17: #{autoencoder_forward.11} parent=0 // pred_fallthru
    _
  // Predicated region
  $region18: #{autoencoder_forward.11} parent=0 // pred_check
    _
  $region19: #{autoencoder_forward.11} parent=0 // pred_check_branch
    %354 = sbr.rel (0) target = $region21
  $region20: #{autoencoder_forward.11} parent=0 // pred_region
    _
  $region21: #{autoencoder_forward.11} parent=0 // pred_fallthru
    _

</llo_original>
